<compile_context>
chip_gen: v5e
topology: v5e:2x2
jax: 0.10.0
libtpu: 0.0.40
codegen_flags: <defaults>
</compile_context>

<pallas_src>
import numpy as np
import jax
import jax.numpy as jnp
from jax.experimental import pallas as pl
from jax.experimental.pallas import tpu as pltpu

# ----------------------------- module config --------------------------------
INPUT_FREQ = 8000
RESAMPLE_FREQ = 8000              # equal -> torchaudio Resample is identity
N_MFCC = 13                       # constructed in __init__ but unused in forward()
MAX_DURATION_MS = 100
MAX_LENGTH = int(MAX_DURATION_MS / 1000 * RESAMPLE_FREQ)   # 800
TARGET_RMS = 0.5

# torchaudio MelSpectrogram defaults
N_FFT = 400
HOP_LENGTH = N_FFT // 2           # 200 (win_length=n_fft, hop=win_length//2)
N_MELS = 128
N_FREQS = N_FFT // 2 + 1          # 201
F_MIN = 0.0
F_MAX = RESAMPLE_FREQ / 2.0

# MXU-friendly padded sizes
K_HALF_PAD = 256                  # per-half-frame contraction dim: 200 -> 256
F_PAD = 256                       # n_freqs 201 -> 256 (lane aligned)
CHUNKS_PER_WAV = (MAX_LENGTH + N_FFT) // HOP_LENGTH   # 6 non-overlapping chunks
FRAMES_PER_WAV = CHUNKS_PER_WAV - 1                    # 5 STFT frames

DFT_DTYPE = jnp.bfloat16          # precision knob: set jnp.float32 for tighter parity
MAX_BATCH_TILE = 168              # 6*168 = 1008 rows per grid step (512-1024 target)


def _round_up(x: int, m: int) -> int:
    return (x + m - 1) // m * m


def _pick_batch_tile(batch: int):
    """(batch elems per grid step, padded batch).

    Rows per tile = 6 * bt. For multi-step grids bt is a multiple of 8 so the
    row tile (48k) satisfies the (16,128) bf16 / (8,128) f32 block rule; small
    batches use a single full-array block (no padding, no constraint). For
    B > 8 we always give the grid >= 2 steps so v7x megacore can shard rows,
    and we pick the tile that minimizes padded-row (dead MXU) waste.
    """
    if batch <= 8:
        return batch, batch                      # one grid step, block == full array
    best = None
    for bt in range(8, MAX_BATCH_TILE + 1, 8):
        b_pad = _round_up(batch, bt)
        if b_pad // bt < 2:                      # keep >= 2 grid steps
            continue
        key = (b_pad - batch, -bt)               # least waste, then biggest tile
        if best is None or key < best[0]:
            best = (key, bt, b_pad)
    if best is None:
        return 8, _round_up(batch, 8)
    return best[1], best[2]


# ------------------------ deterministic parameter setup ---------------------
def _hann_window_periodic(n: int) -> np.ndarray:
    t = np.arange(n, dtype=np.float64)
    return 0.5 - 0.5 * np.cos(2.0 * np.pi * t / n)


def _melscale_fbanks_htk(n_freqs, f_min, f_max, n_mels, sample_rate):
    """Replicates torchaudio.functional.melscale_fbanks (norm=None, htk)."""
    all_freqs = np.linspace(0.0, sample_rate // 2, n_freqs)

    def hz_to_mel(f):
        return 2595.0 * np.log10(1.0 + f / 700.0)

    def mel_to_hz(m):
        return 700.0 * (10.0 ** (m / 2595.0) - 1.0)

    m_pts = np.linspace(hz_to_mel(f_min), hz_to_mel(f_max), n_mels + 2)
    f_pts = mel_to_hz(m_pts)
    f_diff = f_pts[1:] - f_pts[:-1]
    slopes = f_pts[None, :] - all_freqs[:, None]          # (n_freqs, n_mels + 2)
    down = -slopes[:, :-2] / f_diff[:-1]
    up = slopes[:, 2:] / f_diff[1:]
    return np.maximum(0.0, np.minimum(down, up)).astype(np.float32)


def _build_constants():
    # Hann window folded into the DFT weights; split into the two half-frame
    # weight blocks so frames never have to be materialized with 2x overlap.
    win = _hann_window_periodic(N_FFT)                    # (400,)
    n = np.arange(N_FFT, dtype=np.float64)[:, None]
    k = np.arange(N_FREQS, dtype=np.float64)[None, :]
    ang = 2.0 * np.pi * n * k / N_FFT
    cos_w = np.cos(ang) * win[:, None]                    # (400, 201)
    sin_w = np.sin(ang) * win[:, None]                    # sign irrelevant for |.|^2

    def pack(rows):
        w = np.zeros((K_HALF_PAD, 2 * F_PAD), dtype=np.float32)
        w[:HOP_LENGTH, :N_FREQS] = cos_w[rows]
        w[:HOP_LENGTH, F_PAD:F_PAD + N_FREQS] = sin_w[rows]
        return w

    w_lo = pack(slice(0, HOP_LENGTH))          # frame samples   0..199
    w_hi = pack(slice(HOP_LENGTH, N_FFT))      # frame samples 200..399

    fb = np.zeros((F_PAD, N_MELS), dtype=np.float32)      # zero rows for padded freqs
    fb[:N_FREQS, :] = _melscale_fbanks_htk(N_FREQS, F_MIN, F_MAX, N_MELS, RESAMPLE_FREQ)

    return (jnp.asarray(w_lo, dtype=DFT_DTYPE),
            jnp.asarray(w_hi, dtype=DFT_DTYPE),
            jnp.asarray(fb, dtype=jnp.float32))


W_LO, W_HI, MEL_FB = _build_constants()        # (256, 512), (256, 512), (256, 128)


# ------------------------------ fused Pallas kernel --------------------------
def _fused_melspec_kernel(gain2_ref, chunks_ref, w_lo_ref, w_hi_ref, fb_ref, o_ref):
    # Scalar gain^2 from SMEM (RMS normalization folded into the quadratic output).
    g2 = gain2_ref[0, 0]

    chunks = chunks_ref[...]                                   # (rows, 256)

    # Windowed half-frame DFTs on the MXU (bf16 in, f32 accumulate).
    #   spec_lo[r]: chunk r as the FIRST  n_fft/2 samples of frame r
    #   spec_hi[r]: chunk r as the SECOND n_fft/2 samples of frame r-1
    spec_lo = jnp.dot(chunks, w_lo_ref[...], preferred_element_type=jnp.float32)
    spec_hi = jnp.dot(chunks, w_hi_ref[...], preferred_element_type=jnp.float32)

    # Frame r = chunk r (lo) + chunk r+1 (hi): shift spec_hi up one row
    # (== jnp.roll(spec_hi, -1, axis=0)). The wrapped row only lands on each
    # waveform's junk row (chunk 5), which the wrapper drops.
    spec_hi = jnp.concatenate([spec_hi[1:, :], spec_hi[:1, :]], axis=0)
    spec = spec_lo + spec_hi                                   # (rows, 512) f32

    real = spec[:, :F_PAD]                                     # lanes   0..255
    imag = spec[:, F_PAD:]                                     # lanes 256..511
    power = real * real + imag * imag                          # (rows, 256) f32

    # Mel filterbank GEMM kept fully in f32 (~3% of FLOPs; avoids bf16
    # truncation of the power spectrogram).
    mel = jnp.dot(power, fb_ref[...], preferred_element_type=jnp.float32)

    o_ref[...] = mel * g2                                      # (rows, 128) f32


# ------------------------------ forward wrapper ------------------------------
@jax.jit
def audio_preprocessing_forward(waveform: jax.Array) -> jax.Array:
    assert waveform.ndim == 2, "waveform is expected to be of shape (batch_size, num_samples)"
    B, T = waveform.shape
    assert T <= MAX_LENGTH, "padded sequence length is greater than max length"

    # 1) resample: identity (input_freq == resample_freq)
    # TODO(synk): general sinc-interpolation resampling for orig_freq != new_freq.

    # 2) normalize_waveform(target_rms=0.5): global RMS over the raw (B, T)
    #    tensor, matching torch.sqrt(torch.mean(waveform**2)); gain**2 is folded
    #    into the (quadratic) mel output inside the kernel.
    wav_f32 = waveform.astype(jnp.float32)
    rms = jnp.sqrt(jnp.mean(jnp.square(wav_f32)))
    gain = TARGET_RMS / (rms + 1e-6)
    gain2 = (gain * gain).reshape(1, 1)

    # 3) pad_sequence(max_length) + STFT center reflect pad (trace-time glue).
    wav = wav_f32 if T == MAX_LENGTH else jnp.pad(wav_f32, ((0, 0), (0, MAX_LENGTH - T)))
    pad = N_FFT // 2
    wav_p = jnp.pad(wav, ((0, 0), (pad, pad)), mode="reflect")     # (B, 1200)

    # 4) non-overlapping hop-sized chunks (hop == n_fft/2): pure reshape, then a
    #    single fused (row+lane) zero-pad + dtype cast. No 2x frame duplication.
    bt, b_pad = _pick_batch_tile(B)
    rows_tile = bt * CHUNKS_PER_WAV
    r = B * CHUNKS_PER_WAV
    r_pad = b_pad * CHUNKS_PER_WAV
    chunks = wav_p.reshape(r, HOP_LENGTH)
    chunks = jnp.pad(
        chunks, ((0, r_pad - r), (0, K_HALF_PAD - HOP_LENGTH))
    ).astype(DFT_DTYPE)                                            # (r_pad, 256)

    flops = 2 * r_pad * K_HALF_PAD * (2 * F_PAD) * 2 + 2 * r_pad * F_PAD * N_MELS
    bytes_accessed = (chunks.size * chunks.dtype.itemsize
                      + 2 * W_LO.size * W_LO.dtype.itemsize
                      + MEL_FB.size * 4 + r_pad * N_MELS * 4 + 4)

    mel_rows = pl.pallas_call(
        _fused_melspec_kernel,
        out_shape=jax.ShapeDtypeStruct((r_pad, N_MELS), jnp.float32),
        grid=(r_pad // rows_tile,),
        in_specs=[
            # gain^2 scalar lives in SMEM (no per-step waveform DMA / reduction).
            pl.BlockSpec(memory_space=pltpu.MemorySpace.SMEM),
            pl.BlockSpec((rows_tile, K_HALF_PAD), lambda i: (i, 0)),   # chunk tile
            # Constant-index weights: Pallas skips the re-DMA across steps.
            pl.BlockSpec((K_HALF_PAD, 2 * F_PAD), lambda i: (0, 0)),   # W_lo
            pl.BlockSpec((K_HALF_PAD, 2 * F_PAD), lambda i: (0, 0)),   # W_hi
            pl.BlockSpec((F_PAD, N_MELS), lambda i: (0, 0)),           # mel fbanks (f32)
        ],
        out_specs=pl.BlockSpec((rows_tile, N_MELS), lambda i: (i, 0)), # lane-dense
        compiler_params=pltpu.CompilerParams(dimension_semantics=("parallel",)),
        cost_estimate=pl.CostEstimate(flops=flops, transcendentals=0,
                                      bytes_accessed=bytes_accessed),
    )(gain2, chunks, W_LO, W_HI, MEL_FB)

    # Per waveform the 6th row (chunk-5 overlap junk) and any batch padding are
    # dropped; transpose to channels-first (B, n_mels, n_frames) like torchaudio.
    mel = mel_rows[:r].reshape(B, CHUNKS_PER_WAV, N_MELS)[:, :FRAMES_PER_WAV, :]
    return mel.transpose(0, 2, 1)


# ------------------------------------ main -----------------------------------
if __name__ == "__main__":
    key = jax.random.PRNGKey(0)
    # batch=2, num_samples=600 (< MAX_LENGTH=800, exercises the zero padding)
    waveform = jax.random.normal(key, (2, 600), dtype=jnp.float32)

    out = audio_preprocessing_forward(waveform)
    out = jax.block_until_ready(out)

    expected_frames = MAX_LENGTH // HOP_LENGTH + 1   # 5
    assert out.shape == (2, N_MELS, expected_frames), out.shape
    assert out.dtype == jnp.float32
    assert bool(jnp.all(jnp.isfinite(out)))
    print("KERNEL_OK")
</pallas_src>

<mosaic_0001>
module attributes {stable_mosaic.version = 11 : i64} {
  func.func @_fused_melspec_kernel(%arg0: i32, %arg1: memref<1x1xf32, #tpu.memory_space<smem>>, %arg2: memref<12x256xbf16, #tpu.memory_space<vmem>>, %arg3: memref<256x512xbf16, #tpu.memory_space<vmem>>, %arg4: memref<256x512xbf16, #tpu.memory_space<vmem>>, %arg5: memref<256x128xf32, #tpu.memory_space<vmem>>, %arg6: memref<12x128xf32, #tpu.memory_space<vmem>>) attributes {dimension_semantics = [#tpu.dimension_semantics<parallel>], iteration_bounds = array<i64: 1>, scalar_prefetch = 0 : i64, scratch_operands = 0 : i64, tpu.core_type = #tpu.core_type<tc>, window_params = [{transform_indices = @transform_0, window_bounds = array<i64: 1, 1>}, {transform_indices = @transform_1, window_bounds = array<i64: 12, 256>}, {pipeline_mode = #tpu.pipeline_mode<synchronous>, transform_indices = @transform_2, window_bounds = array<i64: 256, 512>}, {pipeline_mode = #tpu.pipeline_mode<synchronous>, transform_indices = @transform_3, window_bounds = array<i64: 256, 512>}, {pipeline_mode = #tpu.pipeline_mode<synchronous>, transform_indices = @transform_4, window_bounds = array<i64: 256, 128>}, {transform_indices = @transform_5, window_bounds = array<i64: 12, 128>}]} {
    %c0 = arith.constant 0 : index
    %c0_0 = arith.constant 0 : index
    %0 = memref.load %arg1[%c0, %c0_0] : memref<1x1xf32, #tpu.memory_space<smem>>
    %c0_1 = arith.constant 0 : index
    %c0_2 = arith.constant 0 : index
    %1 = vector.load %arg2[%c0_1, %c0_2] : memref<12x256xbf16, #tpu.memory_space<vmem>>, vector<12x256xbf16>
    %c0_3 = arith.constant 0 : index
    %c0_4 = arith.constant 0 : index
    %2 = vector.load %arg3[%c0_3, %c0_4] : memref<256x512xbf16, #tpu.memory_space<vmem>>, vector<256x512xbf16>
    %cst = arith.constant dense<0.000000e+00> : vector<12x512xf32>
    %3 = tpu.matmul %1, %2, %cst {dimension_numbers = #tpu.dot_dimension_numbers<[1], [0], [0], [1], [0, 0, 1, 1], [], []>} : vector<12x256xbf16>, vector<256x512xbf16>, vector<12x512xf32> -> vector<12x512xf32>
    %c0_5 = arith.constant 0 : index
    %c0_6 = arith.constant 0 : index
    %4 = vector.load %arg4[%c0_5, %c0_6] : memref<256x512xbf16, #tpu.memory_space<vmem>>, vector<256x512xbf16>
    %cst_7 = arith.constant dense<0.000000e+00> : vector<12x512xf32>
    %5 = tpu.matmul %1, %4, %cst_7 {dimension_numbers = #tpu.dot_dimension_numbers<[1], [0], [0], [1], [0, 0, 1, 1], [], []>} : vector<12x256xbf16>, vector<256x512xbf16>, vector<12x512xf32> -> vector<12x512xf32>
    %6 = vector.extract_strided_slice %5 {offsets = [1, 0], sizes = [11, 512], strides = [1, 1]} : vector<12x512xf32> to vector<11x512xf32>
    %7 = vector.extract_strided_slice %5 {offsets = [0, 0], sizes = [1, 512], strides = [1, 1]} : vector<12x512xf32> to vector<1x512xf32>
    %8 = tpu.concatenate %6, %7 in 0 : vector<11x512xf32>, vector<1x512xf32> -> vector<12x512xf32>
    %9 = arith.addf %3, %8 : vector<12x512xf32>
    %10 = vector.extract_strided_slice %9 {offsets = [0, 0], sizes = [12, 256], strides = [1, 1]} : vector<12x512xf32> to vector<12x256xf32>
    %11 = vector.extract_strided_slice %9 {offsets = [0, 256], sizes = [12, 256], strides = [1, 1]} : vector<12x512xf32> to vector<12x256xf32>
    %12 = arith.mulf %10, %10 : vector<12x256xf32>
    %13 = arith.mulf %11, %11 : vector<12x256xf32>
    %14 = arith.addf %12, %13 : vector<12x256xf32>
    %c0_8 = arith.constant 0 : index
    %c0_9 = arith.constant 0 : index
    %15 = vector.load %arg5[%c0_8, %c0_9] : memref<256x128xf32, #tpu.memory_space<vmem>>, vector<256x128xf32>
    %cst_10 = arith.constant dense<0.000000e+00> : vector<12x128xf32>
    %16 = tpu.matmul %14, %15, %cst_10 {dimension_numbers = #tpu.dot_dimension_numbers<[1], [0], [0], [1], [0, 0, 1, 1], [], []>} : vector<12x256xf32>, vector<256x128xf32>, vector<12x128xf32> -> vector<12x128xf32>
    %17 = vector.broadcast %0 : f32 to vector<12x128xf32>
    %18 = arith.mulf %16, %17 : vector<12x128xf32>
    %c0_11 = arith.constant 0 : index
    %c0_12 = arith.constant 0 : index
    %19 = vector.load %arg6[%c0_11, %c0_12] : memref<12x128xf32, #tpu.memory_space<vmem>>, vector<12x128xf32>
    tpu.vector_store %arg6[%c0_11, %c0_12], %18 {strides = array<i32>} : memref<12x128xf32, #tpu.memory_space<vmem>>, vector<12x128xf32>,
    return
  }
  func.func @transform_0(%arg0: i32) -> (i32, i32) {
    %c0_i32 = arith.constant 0 : i32
    %c0_i32_0 = arith.constant 0 : i32
    %c0_i32_1 = arith.constant 0 : i32
    return %c0_i32, %c0_i32_0 : i32, i32
  }
  func.func @transform_1(%arg0: i32) -> (i32, i32) {
    %c0_i32 = arith.constant 0 : i32
    %c0_i32_0 = arith.constant 0 : i32
    return %arg0, %c0_i32 : i32, i32
  }
  func.func @transform_2(%arg0: i32) -> (i32, i32) {
    %c0_i32 = arith.constant 0 : i32
    %c0_i32_0 = arith.constant 0 : i32
    %c0_i32_1 = arith.constant 0 : i32
    return %c0_i32, %c0_i32_0 : i32, i32
  }
  func.func @transform_3(%arg0: i32) -> (i32, i32) {
    %c0_i32 = arith.constant 0 : i32
    %c0_i32_0 = arith.constant 0 : i32
    %c0_i32_1 = arith.constant 0 : i32
    return %c0_i32, %c0_i32_0 : i32, i32
  }
  func.func @transform_4(%arg0: i32) -> (i32, i32) {
    %c0_i32 = arith.constant 0 : i32
    %c0_i32_0 = arith.constant 0 : i32
    %c0_i32_1 = arith.constant 0 : i32
    return %c0_i32, %c0_i32_0 : i32, i32
  }
  func.func @transform_5(%arg0: i32) -> (i32, i32) {
    %c0_i32 = arith.constant 0 : i32
    %c0_i32_0 = arith.constant 0 : i32
    return %arg0, %c0_i32 : i32, i32
  }
}

</mosaic_0001>

<llo_original>
// kernel: reverse.1
$region0: #{reverse.1}
  %s0 = inlined_call_operand.vmem [shape: bf16[2,256], index: 0, kind: input, shape index: {}]
  %s1 = inlined_call_operand.vmem [shape: bf16[2,256], index: 1, kind: output, shape index: {}]
  %v2 = vlaneseq
  %v3 = vsub.s32 127, %v2
  %4 = vset.pattern.permute.xlu0 %v3
  $region1: #{reverse.1} parent=0
    #allocation0 [shape = 'u8[4096]{0}', space=vmem, size = 0x1000, scoped, tag = 'operand span for operand 0']
    #allocation1 [shape = 'u8[1024]{0}', space=vmem, size = 0x400, scoped, tag = 'packed  for operand 0']
    #allocation2 [shape = 'u8[4096]{0}', space=vmem, size = 0x1000, scoped, tag = 'operand span for operand 1']
    #allocation3 [shape = 'u8[1024]{0}', space=vmem, size = 0x400, scoped, tag = 'packed  for operand 1']
    loop: start=0, step=1, limit=4
    $region2: #{reverse.1} parent=1 // loop_pre_header
      _
    $region3: #{reverse.1} parent=1 // loop_header
      %s6 = sphi 0, %s10
      %p7 = scmp.ge.s32.totalorder %s6, 4
      %s13 = sphi 0, %s25
      %s14 = sphi 0, %s21
      %s15 = sphi 0, %s13
      %s16 = sphi 0, %s14
      %s17 = sphi 0, %s15
      %s18 = sphi 0, %s16
    $region4: #{reverse.1} parent=1 // loop_header_branch
      %9 = sbr.rel (%p7) target = $region8
    $region5: #{reverse.1} parent=1 // loop_body
      %s11 = ssub.s32 %s6, 1
      %s12 = ssub.s32 %s6, 2
      %s19 = sadd.s32 1, %s14
      %p20 = scmp.ge.s32.totalorder %s19, 2
      %s21 = scalar_select %p20, 0, %s19
      %s22 = sadd.s32 1, %s13
      %s23 = scalar_select %p20, %s22, %s13
      %p24 = scmp.ge.s32.totalorder %s23, 1
      %s25 = scalar_select %p24, 0, %s23
      %p26 = scmp.le.s32.totalorder 1, %s6
      %p27 = scmp.lt.s32.totalorder %s6, 3
      %p28 = pnand %p26, %p27
      %p29 = pneg %p28
      // Predicated region
      $region9: #{reverse.1} parent=5 // pred_check
        _
      $region10: #{reverse.1} parent=5 // pred_check_branch
        %31 = sbr.rel (%p28) target = $region12
      $region11: #{reverse.1} parent=5 // pred_region
        %s32 = ssub.s32 %s6, 1
      $region12: #{reverse.1} parent=5 // pred_fallthru
        _
      %p33 = scmp.lt.s32.totalorder %s6, 2
      // Predicated region
      $region13: #{reverse.1} parent=5 // pred_check
        %p34 = pneg %p33
      $region14: #{reverse.1} parent=5 // pred_check_branch
        %36 = sbr.rel (%p34) target = $region16
      $region15: #{reverse.1} parent=5 // pred_region
        %s37 = sand.u32 %s6, 1
        %s38 = sand.u32 %s6, 1
        %s39 = scalar_lea.vmem [#allocation1], %s38
        %s40 = ssub.s32 1, %s14
        %s41 = smul.addr %s13, 2
        %s42 = sadd.s32 %s40, %s41
        %s43 = scalar_lea.vmem %s0, %s42
        // Predicated region
        $region17: #{reverse.1} parent=15 // pred_check
          _
        $region18: #{reverse.1} parent=15 // pred_check_branch
          %45 = sbr.rel (0) target = $region20
        $region19: #{reverse.1} parent=15 // pred_region
          // Predicated region
          $region21: #{reverse.1} parent=19 // pred_check
            _
          $region22: #{reverse.1} parent=19 // pred_check_branch
            %47 = sbr.rel target = $region24
          $region23: #{reverse.1} parent=19 // pred_region
            // Predicated region
            $region36: #{reverse.1} parent=23 // pred_check
              _
            $region37: #{reverse.1} parent=23 // pred_check_branch
              %63 = sbr.rel (0) target = $region39
            $region38: #{reverse.1} parent=23 // pred_region
              %s65 = ssub.s32 2, 1
              loop: start=0, step=1, limit=1
              $region40: #{reverse.1} parent=38 // loop_pre_header
                _
              $region41: #{reverse.1} parent=38 // loop_header
                %s67 = sphi 0, %s71
                %p68 = scmp.ge.s32.totalorder %s67, 1
                %s72 = sphi %s43, %s43
                %s73 = sphi %s39, %s39
              $region42: #{reverse.1} parent=38 // loop_header_branch
                %70 = sbr.rel (%p68) target = $region46
              $region43: #{reverse.1} parent=38 // loop_body
                %v74 = vld [vmem:[%s72] sm:%s65]
                %75 = vst [vmem:[%s73] sm:%s65] %v74
              $region44: #{reverse.1} parent=38 // loop_footer
                %s71 = sadd.s32 1, %s67
              $region45: #{reverse.1} parent=38 // loop_footer_branch
                %66 = sbr.rel target = $region41
              $region46: #{reverse.1} parent=38 // loop_exit
                _
            $region39: #{reverse.1} parent=23 // pred_fallthru
              _
          $region24: #{reverse.1} parent=19 // pred_fallthru
            _
          // Predicated region
          $region25: #{reverse.1} parent=19 // pred_check
            _
          $region26: #{reverse.1} parent=19 // pred_check_branch
            %49 = sbr.rel (0) target = $region28
          $region27: #{reverse.1} parent=19 // pred_region
            %s51 = ssub.s32 2, 1
            loop: start=0, step=1, limit=1
            $region29: #{reverse.1} parent=27 // loop_pre_header
              _
            $region30: #{reverse.1} parent=27 // loop_header
              %s53 = sphi 0, %s57
              %p54 = scmp.ge.s32.totalorder %s53, 1
              %s58 = sphi %s43, %s43
              %s59 = sphi %s39, %s39
            $region31: #{reverse.1} parent=27 // loop_header_branch
              %56 = sbr.rel (%p54) target = $region35
            $region32: #{reverse.1} parent=27 // loop_body
              %v60 = vld [vmem:[%s58] sm:%s51]
              %61 = vst [vmem:[%s59] sm:%s51] %v60
            $region33: #{reverse.1} parent=27 // loop_footer
              %s57 = sadd.s32 1, %s53
            $region34: #{reverse.1} parent=27 // loop_footer_branch
              %52 = sbr.rel target = $region30
            $region35: #{reverse.1} parent=27 // loop_exit
              _
          $region28: #{reverse.1} parent=19 // pred_fallthru
            _
        $region20: #{reverse.1} parent=15 // pred_fallthru
          _
        %76 = vnop
      $region16: #{reverse.1} parent=5 // pred_fallthru
        _
      %p77 = scmp.le.s32.totalorder 1, %s6
      %p78 = scmp.lt.s32.totalorder %s6, 3
      %p79 = pnand %p77, %p78
      %p80 = pneg %p79
      // Predicated region
      $region47: #{reverse.1} parent=5 // pred_check
        _
      $region48: #{reverse.1} parent=5 // pred_check_branch
        %82 = sbr.rel (%p79) target = $region50
      $region49: #{reverse.1} parent=5 // pred_region
        %s83 = ssub.s32 %s6, 1
        %s84 = sand.u32 %s11, 1
        %s85 = sand.u32 %s11, 1
        %s86 = scalar_lea.vmem [#allocation1], %s85
        %s87 = sand.u32 %s11, 1
        %s88 = sand.u32 %s11, 1
        %s89 = scalar_lea.vmem [#allocation1], %s88
        %s90 = sand.u32 %s11, 1
        %s91 = sand.u32 %s11, 1
        %s92 = scalar_lea.vmem [#allocation3], %s91
        %s94 = ssub.s32 4, 1
        %s95 = sshrl.u32 %s94, 1
        %s96 = sor.u32 %s94, %s95
        %s97 = sand.u32 %s96, 85
        %s98 = sshrl.u32 %s97, 1
        %s99 = sor.u32 %s97, %s98
        %s100 = sand.u32 51, %s99
        %s101 = sshrl.u32 %s100, 2
        %s102 = sor.u32 %s100, %s101
        %s103 = sand.u32 15, %s102
        %v104 = vld [vmem:[%s89] sm:%s103]
        %v105 = vunpack.c.l.bf16 %v104
        %v106 = vunpack.c.h.bf16 %v104
        %107 = vst [vmem:[#allocation0] sm:%s94] %v105
        %s108 = ssub.s32 1, %s16
        %v109 = vld [vmem:[#allocation0] sm:$0xff]
        %110 = vperm.xlu0 %4, %v109
        %v111 = vpop.permute.xlu0 %110
        %112 = vst [vmem:[#allocation2] sm:$0xff] %v111
        %s114 = ssub.s32 4, 1
        %v115 = vld [vmem:[#allocation2] sm:%s114]
        %v116 = vpack.c.bf16 0.0, %v115
        %s118 = ssub.s32 2, 1
        %119 = vst [vmem:[%s92] sm:%s118] %v116
        %s120 = sand.u32 %s11, 1
        %s121 = sand.u32 %s11, 1
        %s122 = scalar_lea.vmem [#allocation3], %s121
        %s123 = smul.addr %s15, 2
        %s124 = sadd.s32 %s16, %s123
        %s125 = scalar_lea.vmem %s1, %s124
        // Predicated region
        $region51: #{reverse.1} parent=49 // pred_check
          _
        $region52: #{reverse.1} parent=49 // pred_check_branch
          %127 = sbr.rel (0) target = $region54
        $region53: #{reverse.1} parent=49 // pred_region
          // Predicated region
          $region55: #{reverse.1} parent=53 // pred_check
            _
          $region56: #{reverse.1} parent=53 // pred_check_branch
            %129 = sbr.rel target = $region58
          $region57: #{reverse.1} parent=53 // pred_region
            // Predicated region
            $region70: #{reverse.1} parent=57 // pred_check
              _
            $region71: #{reverse.1} parent=57 // pred_check_branch
              %145 = sbr.rel (0) target = $region73
            $region72: #{reverse.1} parent=57 // pred_region
              %s147 = ssub.s32 2, 1
              loop: start=0, step=1, limit=1
              $region74: #{reverse.1} parent=72 // loop_pre_header
                _
              $region75: #{reverse.1} parent=72 // loop_header
                %s149 = sphi 0, %s153
                %p150 = scmp.ge.s32.totalorder %s149, 1
                %s154 = sphi %s122, %s122
                %s155 = sphi %s125, %s125
              $region76: #{reverse.1} parent=72 // loop_header_branch
                %152 = sbr.rel (%p150) target = $region80
              $region77: #{reverse.1} parent=72 // loop_body
                %v156 = vld [vmem:[%s154] sm:%s147]
                %157 = vst [vmem:[%s155] sm:%s147] %v156
              $region78: #{reverse.1} parent=72 // loop_footer
                %s153 = sadd.s32 1, %s149
              $region79: #{reverse.1} parent=72 // loop_footer_branch
                %148 = sbr.rel target = $region75
              $region80: #{reverse.1} parent=72 // loop_exit
                _
            $region73: #{reverse.1} parent=57 // pred_fallthru
              _
          $region58: #{reverse.1} parent=53 // pred_fallthru
            _
          // Predicated region
          $region59: #{reverse.1} parent=53 // pred_check
            _
          $region60: #{reverse.1} parent=53 // pred_check_branch
            %131 = sbr.rel (0) target = $region62
          $region61: #{reverse.1} parent=53 // pred_region
            %s133 = ssub.s32 2, 1
            loop: start=0, step=1, limit=1
            $region63: #{reverse.1} parent=61 // loop_pre_header
              _
            $region64: #{reverse.1} parent=61 // loop_header
              %s135 = sphi 0, %s139
              %p136 = scmp.ge.s32.totalorder %s135, 1
              %s140 = sphi %s122, %s122
              %s141 = sphi %s125, %s125
            $region65: #{reverse.1} parent=61 // loop_header_branch
              %138 = sbr.rel (%p136) target = $region69
            $region66: #{reverse.1} parent=61 // loop_body
              %v142 = vld [vmem:[%s140] sm:%s133]
              %143 = vst [vmem:[%s141] sm:%s133] %v142
            $region67: #{reverse.1} parent=61 // loop_footer
              %s139 = sadd.s32 1, %s135
            $region68: #{reverse.1} parent=61 // loop_footer_branch
              %134 = sbr.rel target = $region64
            $region69: #{reverse.1} parent=61 // loop_exit
              _
          $region62: #{reverse.1} parent=53 // pred_fallthru
            _
        $region54: #{reverse.1} parent=49 // pred_fallthru
          _
        %158 = vnop
      $region50: #{reverse.1} parent=5 // pred_fallthru
        _
      %p159 = scmp.le.s32.totalorder 2, %s6
      // Predicated region
      $region81: #{reverse.1} parent=5 // pred_check
        %p160 = pneg %p159
      $region82: #{reverse.1} parent=5 // pred_check_branch
        %162 = sbr.rel (%p160) target = $region84
      $region83: #{reverse.1} parent=5 // pred_region
        %s163 = ssub.s32 %s6, 2
        %s164 = sand.u32 %s12, 1
        %s165 = sand.u32 %s12, 1
        %s166 = scalar_lea.vmem [#allocation3], %s165
      $region84: #{reverse.1} parent=5 // pred_fallthru
        _
    $region6: #{reverse.1} parent=1 // loop_footer
      %s10 = sadd.s32 1, %s6
    $region7: #{reverse.1} parent=1 // loop_footer_branch
      %5 = sbr.rel target = $region3
    $region8: #{reverse.1} parent=1 // loop_exit
      _

// kernel: audio_preprocessing_forward.1
$region0: #{audio_preprocessing_forward.1}
  #allocation0 [shape = 'u32[]', space=smem, size = 0x4, offset = 0x4, fixed_abs, tag = 'smem constant byte address 0x4 - core index']
  #allocation1 [shape = 'u32[72,128]{1,0:T(1,128)}', space=vmem, size = 0x9000, scoped, tag = 'internal scratch']
  #allocation2 [shape = 'f32[1,1]{1,0:T(1,128)S(6)}', space=smem, size = 0x200, scoped, tag = 'scoped memory for audio_preprocessing_forward.1']
  %s0 = inlined_call_operand.<no memory space> [shape: f32[1,1], index: 0, kind: input, shape index: {}]
  %s1 = inlined_call_operand.vmem [shape: bf16[12,256], index: 1, kind: input, shape index: {}]
  %s2 = inlined_call_operand.hbm [shape: bf16[256,512], index: 2, kind: input, shape index: {}]
  %s3 = inlined_call_operand.hbm [shape: bf16[256,512], index: 3, kind: input, shape index: {}]
  %s4 = inlined_call_operand.hbm [shape: f32[256,128], index: 4, kind: input, shape index: {}]
  %s5 = inlined_call_operand.vmem [shape: f32[12,128], index: 5, kind: output, shape index: {}]
  %s6 = sld [smem:[#allocation0]]
  $region42: #{audio_preprocessing_forward.1} parent=0
    _
  %s8 = ssub.s32 1, %s6
  %s9 = scalar_select 0, %s8, %s6
  %10 = sst [smem:[#allocation2]] %s0
  $region1: #{audio_preprocessing_forward.1} parent=0
    #allocation3 [shape = 'u8[262144]{0}', space=vmem, size = 0x40000, scoped, tag = 'input window, operand 2, single buffered']
    #allocation4 [shape = 's32[1]{0}', space=sflag, size = 0x4, scoped, tag = 'scoped memory for audio_preprocessing_forward.1']
    #allocation5 [shape = 'u8[262144]{0}', space=vmem, size = 0x40000, scoped, tag = 'input window, operand 3, single buffered']
    #allocation6 [shape = 's32[1]{0}', space=sflag, size = 0x4, scoped, tag = 'scoped memory for audio_preprocessing_forward.1']
    #allocation7 [shape = 'u8[131072]{0}', space=vmem, size = 0x20000, scoped, tag = 'input window, operand 4, single buffered']
    %11 = vsyncpa [#allocation4], 0
    %12 = vsyncpa [#allocation6], 0
    // Predicated region
    $region2: #{audio_preprocessing_forward.1} parent=1 // pred_check
      _
    $region3: #{audio_preprocessing_forward.1} parent=1 // pred_check_branch
      %14 = sbr.rel (0) target = $region5
    $region4: #{audio_preprocessing_forward.1} parent=1 // pred_region
      _
    $region5: #{audio_preprocessing_forward.1} parent=1 // pred_fallthru
      _
    // Predicated region
    $region6: #{audio_preprocessing_forward.1} parent=1 // pred_check
      _
    $region7: #{audio_preprocessing_forward.1} parent=1 // pred_check_branch
      %16 = sbr.rel (0) target = $region9
    $region8: #{audio_preprocessing_forward.1} parent=1 // pred_region
      _
    $region9: #{audio_preprocessing_forward.1} parent=1 // pred_fallthru
      _
    // Predicated region
    $region10: #{audio_preprocessing_forward.1} parent=1 // pred_check
      _
    $region11: #{audio_preprocessing_forward.1} parent=1 // pred_check_branch
      %18 = sbr.rel (0) target = $region13
    $region12: #{audio_preprocessing_forward.1} parent=1 // pred_region
      %20 = vsyncadd [#allocation4], 0
      %s21 = sshll.u32 %s2, 4
      %s22 = int_to_ptr.hbm [resolvable:$true] %s21
      %s23 = sshll.u32 [#allocation3], 4
      %s24 = int_to_ptr.vmem [resolvable:$true] %s23
      %29 = dma.hbm_to_vmem [thread:$0]  %s22, 8192, %s24, [#allocation4], 256, 256, 16
    $region13: #{audio_preprocessing_forward.1} parent=1 // pred_fallthru
      _
    // Predicated region
    $region14: #{audio_preprocessing_forward.1} parent=1 // pred_check
      _
    $region15: #{audio_preprocessing_forward.1} parent=1 // pred_check_branch
      %31 = sbr.rel (0) target = $region17
    $region16: #{audio_preprocessing_forward.1} parent=1 // pred_region
      %33 = vsyncadd [#allocation6], 0
      %s34 = sshll.u32 %s3, 4
      %s35 = int_to_ptr.hbm [resolvable:$true] %s34
      %s36 = sshll.u32 [#allocation5], 4
      %s37 = int_to_ptr.vmem [resolvable:$true] %s36
      %42 = dma.hbm_to_vmem [thread:$0]  %s35, 8192, %s37, [#allocation6], 256, 256, 16
    $region17: #{audio_preprocessing_forward.1} parent=1 // pred_fallthru
      _
    // Predicated region
    $region18: #{audio_preprocessing_forward.1} parent=1 // pred_check
      _
    $region19: #{audio_preprocessing_forward.1} parent=1 // pred_check_branch
      %44 = sbr.rel (0) target = $region21
    $region20: #{audio_preprocessing_forward.1} parent=1 // pred_region
      %46 = vsyncadd [#allocation6], 0
      %s47 = sshll.u32 %s4, 4
      %s48 = int_to_ptr.hbm [resolvable:$true] %s47
      %s49 = sshll.u32 [#allocation7], 4
      %s50 = int_to_ptr.vmem [resolvable:$true] %s49
      %55 = dma.hbm_to_vmem [thread:$0]  %s48, 4096, %s50, [#allocation6], 128, 128, 8
    $region21: #{audio_preprocessing_forward.1} parent=1 // pred_fallthru
      _
    // Predicated region
    $region22: #{audio_preprocessing_forward.1} parent=1 // pred_check
      _
    $region23: #{audio_preprocessing_forward.1} parent=1 // pred_check_branch
      %57 = sbr.rel (0) target = $region25
    $region24: #{audio_preprocessing_forward.1} parent=1 // pred_region
      %59 = dma.done [#allocation4], 8192
    $region25: #{audio_preprocessing_forward.1} parent=1 // pred_fallthru
      _
    // Predicated region
    $region26: #{audio_preprocessing_forward.1} parent=1 // pred_check
      _
    $region27: #{audio_preprocessing_forward.1} parent=1 // pred_check_branch
      %61 = sbr.rel (0) target = $region29
    $region28: #{audio_preprocessing_forward.1} parent=1 // pred_region
      %63 = dma.done [#allocation6], 8192
    $region29: #{audio_preprocessing_forward.1} parent=1 // pred_fallthru
      _
    // Predicated region
    $region30: #{audio_preprocessing_forward.1} parent=1 // pred_check
      _
    $region31: #{audio_preprocessing_forward.1} parent=1 // pred_check_branch
      %65 = sbr.rel (0) target = $region33
    $region32: #{audio_preprocessing_forward.1} parent=1 // pred_region
      %67 = dma.done [#allocation6], 4096
    $region33: #{audio_preprocessing_forward.1} parent=1 // pred_fallthru
      _
    %s68 = sld [smem:[#allocation2]]
    %v69 = vld [vmem:[%s1] sm:$0xff]
    %v70 = vld [vmem:[%s1 + $0x8] sm:$0x33]
    %v71 = vld [vmem:[#allocation3] sm:$0xff]
    %v72 = vld [vmem:[#allocation3 + $0x8] sm:$0xff]
    %v73 = vld [vmem:[#allocation3 + $0x10] sm:$0xff]
    %v74 = vld [vmem:[#allocation3 + $0x18] sm:$0xff]
    %v75 = vld [vmem:[#allocation3 + $0x20] sm:$0xff]
    %v76 = vld [vmem:[#allocation3 + $0x28] sm:$0xff]
    %v77 = vld [vmem:[#allocation3 + $0x30] sm:$0xff]
    %v78 = vld [vmem:[#allocation3 + $0x38] sm:$0xff]
    %v79 = vld [vmem:[#allocation3 + $0x40] sm:$0xff]
    %v80 = vld [vmem:[#allocation3 + $0x48] sm:$0xff]
    %v81 = vld [vmem:[#allocation3 + $0x50] sm:$0xff]
    %v82 = vld [vmem:[#allocation3 + $0x58] sm:$0xff]
    %v83 = vld [vmem:[#allocation3 + $0x60] sm:$0xff]
    %v84 = vld [vmem:[#allocation3 + $0x68] sm:$0xff]
    %v85 = vld [vmem:[#allocation3 + $0x70] sm:$0xff]
    %v86 = vld [vmem:[#allocation3 + $0x78] sm:$0xff]
    %v87 = vld [vmem:[#allocation3 + $0x80] sm:$0xff]
    %v88 = vld [vmem:[#allocation3 + $0x88] sm:$0xff]
    %v89 = vld [vmem:[#allocation3 + $0x90] sm:$0xff]
    %v90 = vld [vmem:[#allocation3 + $0x98] sm:$0xff]
    %v91 = vld [vmem:[#allocation3 + $0xa0] sm:$0xff]
    %v92 = vld [vmem:[#allocation3 + $0xa8] sm:$0xff]
    %v93 = vld [vmem:[#allocation3 + $0xb0] sm:$0xff]
    %v94 = vld [vmem:[#allocation3 + $0xb8] sm:$0xff]
    %v95 = vld [vmem:[#allocation3 + $0xc0] sm:$0xff]
    %v96 = vld [vmem:[#allocation3 + $0xc8] sm:$0xff]
    %v97 = vld [vmem:[#allocation3 + $0xd0] sm:$0xff]
    %v98 = vld [vmem:[#allocation3 + $0xd8] sm:$0xff]
    %v99 = vld [vmem:[#allocation3 + $0xe0] sm:$0xff]
    %v100 = vld [vmem:[#allocation3 + $0xe8] sm:$0xff]
    %v101 = vld [vmem:[#allocation3 + $0xf0] sm:$0xff]
    %v102 = vld [vmem:[#allocation3 + $0xf8] sm:$0xff]
    %v103 = vld [vmem:[#allocation3 + $0x100] sm:$0xff]
    %v104 = vld [vmem:[#allocation3 + $0x108] sm:$0xff]
    %v105 = vld [vmem:[#allocation3 + $0x110] sm:$0xff]
    %v106 = vld [vmem:[#allocation3 + $0x118] sm:$0xff]
    %v107 = vld [vmem:[#allocation3 + $0x120] sm:$0xff]
    %v108 = vld [vmem:[#allocation3 + $0x128] sm:$0xff]
    %v109 = vld [vmem:[#allocation3 + $0x130] sm:$0xff]
    %v110 = vld [vmem:[#allocation3 + $0x138] sm:$0xff]
    %v111 = vld [vmem:[#allocation3 + $0x140] sm:$0xff]
    %v112 = vld [vmem:[#allocation3 + $0x148] sm:$0xff]
    %v113 = vld [vmem:[#allocation3 + $0x150] sm:$0xff]
    %v114 = vld [vmem:[#allocation3 + $0x158] sm:$0xff]
    %v115 = vld [vmem:[#allocation3 + $0x160] sm:$0xff]
    %v116 = vld [vmem:[#allocation3 + $0x168] sm:$0xff]
    %v117 = vld [vmem:[#allocation3 + $0x170] sm:$0xff]
    %v118 = vld [vmem:[#allocation3 + $0x178] sm:$0xff]
    %v119 = vld [vmem:[#allocation3 + $0x180] sm:$0xff]
    %v120 = vld [vmem:[#allocation3 + $0x188] sm:$0xff]
    %v121 = vld [vmem:[#allocation3 + $0x190] sm:$0xff]
    %v122 = vld [vmem:[#allocation3 + $0x198] sm:$0xff]
    %v123 = vld [vmem:[#allocation3 + $0x1a0] sm:$0xff]
    %v124 = vld [vmem:[#allocation3 + $0x1a8] sm:$0xff]
    %v125 = vld [vmem:[#allocation3 + $0x1b0] sm:$0xff]
    %v126 = vld [vmem:[#allocation3 + $0x1b8] sm:$0xff]
    %v127 = vld [vmem:[#allocation3 + $0x1c0] sm:$0xff]
    %v128 = vld [vmem:[#allocation3 + $0x1c8] sm:$0xff]
    %v129 = vld [vmem:[#allocation3 + $0x1d0] sm:$0xff]
    %v130 = vld [vmem:[#allocation3 + $0x1d8] sm:$0xff]
    %v131 = vld [vmem:[#allocation3 + $0x1e0] sm:$0xff]
    %v132 = vld [vmem:[#allocation3 + $0x1e8] sm:$0xff]
    %v133 = vld [vmem:[#allocation3 + $0x1f0] sm:$0xff]
    %v134 = vld [vmem:[#allocation3 + $0x1f8] sm:$0xff]
    %v135 = vld [vmem:[#allocation5] sm:$0xff]
    %v136 = vld [vmem:[#allocation5 + $0x8] sm:$0xff]
    %v137 = vld [vmem:[#allocation5 + $0x10] sm:$0xff]
    %v138 = vld [vmem:[#allocation5 + $0x18] sm:$0xff]
    %v139 = vld [vmem:[#allocation5 + $0x20] sm:$0xff]
    %v140 = vld [vmem:[#allocation5 + $0x28] sm:$0xff]
    %v141 = vld [vmem:[#allocation5 + $0x30] sm:$0xff]
    %v142 = vld [vmem:[#allocation5 + $0x38] sm:$0xff]
    %v143 = vld [vmem:[#allocation5 + $0x40] sm:$0xff]
    %v144 = vld [vmem:[#allocation5 + $0x48] sm:$0xff]
    %v145 = vld [vmem:[#allocation5 + $0x50] sm:$0xff]
    %v146 = vld [vmem:[#allocation5 + $0x58] sm:$0xff]
    %v147 = vld [vmem:[#allocation5 + $0x60] sm:$0xff]
    %v148 = vld [vmem:[#allocation5 + $0x68] sm:$0xff]
    %v149 = vld [vmem:[#allocation5 + $0x70] sm:$0xff]
    %v150 = vld [vmem:[#allocation5 + $0x78] sm:$0xff]
    %v151 = vld [vmem:[#allocation5 + $0x80] sm:$0xff]
    %v152 = vld [vmem:[#allocation5 + $0x88] sm:$0xff]
    %v153 = vld [vmem:[#allocation5 + $0x90] sm:$0xff]
    %v154 = vld [vmem:[#allocation5 + $0x98] sm:$0xff]
    %v155 = vld [vmem:[#allocation5 + $0xa0] sm:$0xff]
    %v156 = vld [vmem:[#allocation5 + $0xa8] sm:$0xff]
    %v157 = vld [vmem:[#allocation5 + $0xb0] sm:$0xff]
    %v158 = vld [vmem:[#allocation5 + $0xb8] sm:$0xff]
    %v159 = vld [vmem:[#allocation5 + $0xc0] sm:$0xff]
    %v160 = vld [vmem:[#allocation5 + $0xc8] sm:$0xff]
    %v161 = vld [vmem:[#allocation5 + $0xd0] sm:$0xff]
    %v162 = vld [vmem:[#allocation5 + $0xd8] sm:$0xff]
    %v163 = vld [vmem:[#allocation5 + $0xe0] sm:$0xff]
    %v164 = vld [vmem:[#allocation5 + $0xe8] sm:$0xff]
    %v165 = vld [vmem:[#allocation5 + $0xf0] sm:$0xff]
    %v166 = vld [vmem:[#allocation5 + $0xf8] sm:$0xff]
    %v167 = vld [vmem:[#allocation5 + $0x100] sm:$0xff]
    %v168 = vld [vmem:[#allocation5 + $0x108] sm:$0xff]
    %v169 = vld [vmem:[#allocation5 + $0x110] sm:$0xff]
    %v170 = vld [vmem:[#allocation5 + $0x118] sm:$0xff]
    %v171 = vld [vmem:[#allocation5 + $0x120] sm:$0xff]
    %v172 = vld [vmem:[#allocation5 + $0x128] sm:$0xff]
    %v173 = vld [vmem:[#allocation5 + $0x130] sm:$0xff]
    %v174 = vld [vmem:[#allocation5 + $0x138] sm:$0xff]
    %v175 = vld [vmem:[#allocation5 + $0x140] sm:$0xff]
    %v176 = vld [vmem:[#allocation5 + $0x148] sm:$0xff]
    %v177 = vld [vmem:[#allocation5 + $0x150] sm:$0xff]
    %v178 = vld [vmem:[#allocation5 + $0x158] sm:$0xff]
    %v179 = vld [vmem:[#allocation5 + $0x160] sm:$0xff]
    %v180 = vld [vmem:[#allocation5 + $0x168] sm:$0xff]
    %v181 = vld [vmem:[#allocation5 + $0x170] sm:$0xff]
    %v182 = vld [vmem:[#allocation5 + $0x178] sm:$0xff]
    %v183 = vld [vmem:[#allocation5 + $0x180] sm:$0xff]
    %v184 = vld [vmem:[#allocation5 + $0x188] sm:$0xff]
    %v185 = vld [vmem:[#allocation5 + $0x190] sm:$0xff]
    %v186 = vld [vmem:[#allocation5 + $0x198] sm:$0xff]
    %v187 = vld [vmem:[#allocation5 + $0x1a0] sm:$0xff]
    %v188 = vld [vmem:[#allocation5 + $0x1a8] sm:$0xff]
    %v189 = vld [vmem:[#allocation5 + $0x1b0] sm:$0xff]
    %v190 = vld [vmem:[#allocation5 + $0x1b8] sm:$0xff]
    %v191 = vld [vmem:[#allocation5 + $0x1c0] sm:$0xff]
    %v192 = vld [vmem:[#allocation5 + $0x1c8] sm:$0xff]
    %v193 = vld [vmem:[#allocation5 + $0x1d0] sm:$0xff]
    %v194 = vld [vmem:[#allocation5 + $0x1d8] sm:$0xff]
    %v195 = vld [vmem:[#allocation5 + $0x1e0] sm:$0xff]
    %v196 = vld [vmem:[#allocation5 + $0x1e8] sm:$0xff]
    %v197 = vld [vmem:[#allocation5 + $0x1f0] sm:$0xff]
    %v198 = vld [vmem:[#allocation5 + $0x1f8] sm:$0xff]
    %v201 = vunpack.c.l.b16 %v69
    %v202 = vunpack.c.h.b16 %v69
    %v203 = vunpack.c.l.b16 %v70
    %v204 = vunpack.c.h.b16 %v70
    %v205 = vpack.c.b16 %v203, %v201
    %v206 = vpack.c.b16 %v204, %v202
    %v273 = vunpack.c.l.b16 %v135
    %v274 = vunpack.c.h.b16 %v135
    %v275 = vunpack.c.l.b16 %v136
    %v276 = vunpack.c.h.b16 %v136
    %v277 = vunpack.c.l.b16 %v137
    %v278 = vunpack.c.h.b16 %v137
    %v279 = vunpack.c.l.b16 %v138
    %v280 = vunpack.c.h.b16 %v138
    %v281 = vunpack.c.l.b16 %v139
    %v282 = vunpack.c.h.b16 %v139
    %v283 = vunpack.c.l.b16 %v140
    %v284 = vunpack.c.h.b16 %v140
    %v285 = vunpack.c.l.b16 %v141
    %v286 = vunpack.c.h.b16 %v141
    %v287 = vunpack.c.l.b16 %v142
    %v288 = vunpack.c.h.b16 %v142
    %v289 = vunpack.c.l.b16 %v143
    %v290 = vunpack.c.h.b16 %v143
    %v291 = vunpack.c.l.b16 %v144
    %v292 = vunpack.c.h.b16 %v144
    %v293 = vunpack.c.l.b16 %v145
    %v294 = vunpack.c.h.b16 %v145
    %v295 = vunpack.c.l.b16 %v146
    %v296 = vunpack.c.h.b16 %v146
    %v297 = vunpack.c.l.b16 %v147
    %v298 = vunpack.c.h.b16 %v147
    %v299 = vunpack.c.l.b16 %v148
    %v300 = vunpack.c.h.b16 %v148
    %v301 = vunpack.c.l.b16 %v149
    %v302 = vunpack.c.h.b16 %v149
    %v303 = vunpack.c.l.b16 %v150
    %v304 = vunpack.c.h.b16 %v150
    %v305 = vunpack.c.l.b16 %v151
    %v306 = vunpack.c.h.b16 %v151
    %v307 = vunpack.c.l.b16 %v152
    %v308 = vunpack.c.h.b16 %v152
    %v309 = vunpack.c.l.b16 %v153
    %v310 = vunpack.c.h.b16 %v153
    %v311 = vunpack.c.l.b16 %v154
    %v312 = vunpack.c.h.b16 %v154
    %v313 = vunpack.c.l.b16 %v155
    %v314 = vunpack.c.h.b16 %v155
    %v315 = vunpack.c.l.b16 %v156
    %v316 = vunpack.c.h.b16 %v156
    %v317 = vunpack.c.l.b16 %v157
    %v318 = vunpack.c.h.b16 %v157
    %v319 = vunpack.c.l.b16 %v158
    %v320 = vunpack.c.h.b16 %v158
    %v321 = vunpack.c.l.b16 %v159
    %v322 = vunpack.c.h.b16 %v159
    %v323 = vunpack.c.l.b16 %v160
    %v324 = vunpack.c.h.b16 %v160
    %v325 = vunpack.c.l.b16 %v161
    %v326 = vunpack.c.h.b16 %v161
    %v327 = vunpack.c.l.b16 %v162
    %v328 = vunpack.c.h.b16 %v162
    %v329 = vunpack.c.l.b16 %v163
    %v330 = vunpack.c.h.b16 %v163
    %v331 = vunpack.c.l.b16 %v164
    %v332 = vunpack.c.h.b16 %v164
    %v333 = vunpack.c.l.b16 %v165
    %v334 = vunpack.c.h.b16 %v165
    %v335 = vunpack.c.l.b16 %v166
    %v336 = vunpack.c.h.b16 %v166
    %v337 = vunpack.c.l.b16 %v167
    %v338 = vunpack.c.h.b16 %v167
    %v339 = vunpack.c.l.b16 %v168
    %v340 = vunpack.c.h.b16 %v168
    %v341 = vunpack.c.l.b16 %v169
    %v342 = vunpack.c.h.b16 %v169
    %v343 = vunpack.c.l.b16 %v170
    %v344 = vunpack.c.h.b16 %v170
    %v345 = vunpack.c.l.b16 %v171
    %v346 = vunpack.c.h.b16 %v171
    %v347 = vunpack.c.l.b16 %v172
    %v348 = vunpack.c.h.b16 %v172
    %v349 = vunpack.c.l.b16 %v173
    %v350 = vunpack.c.h.b16 %v173
    %v351 = vunpack.c.l.b16 %v174
    %v352 = vunpack.c.h.b16 %v174
    %v353 = vunpack.c.l.b16 %v175
    %v354 = vunpack.c.h.b16 %v175
    %v355 = vunpack.c.l.b16 %v176
    %v356 = vunpack.c.h.b16 %v176
    %v357 = vunpack.c.l.b16 %v177
    %v358 = vunpack.c.h.b16 %v177
    %v359 = vunpack.c.l.b16 %v178
    %v360 = vunpack.c.h.b16 %v178
    %v361 = vunpack.c.l.b16 %v179
    %v362 = vunpack.c.h.b16 %v179
    %v363 = vunpack.c.l.b16 %v180
    %v364 = vunpack.c.h.b16 %v180
    %v365 = vunpack.c.l.b16 %v181
    %v366 = vunpack.c.h.b16 %v181
    %v367 = vunpack.c.l.b16 %v182
    %v368 = vunpack.c.h.b16 %v182
    %v369 = vunpack.c.l.b16 %v183
    %v370 = vunpack.c.h.b16 %v183
    %v371 = vunpack.c.l.b16 %v184
    %v372 = vunpack.c.h.b16 %v184
    %v373 = vunpack.c.l.b16 %v185
    %v374 = vunpack.c.h.b16 %v185
    %v375 = vunpack.c.l.b16 %v186
    %v376 = vunpack.c.h.b16 %v186
    %v377 = vunpack.c.l.b16 %v187
    %v378 = vunpack.c.h.b16 %v187
    %v379 = vunpack.c.l.b16 %v188
    %v380 = vunpack.c.h.b16 %v188
    %v381 = vunpack.c.l.b16 %v189
    %v382 = vunpack.c.h.b16 %v189
    %v383 = vunpack.c.l.b16 %v190
    %v384 = vunpack.c.h.b16 %v190
    %v385 = vunpack.c.l.b16 %v191
    %v386 = vunpack.c.h.b16 %v191
    %v387 = vunpack.c.l.b16 %v192
    %v388 = vunpack.c.h.b16 %v192
    %v389 = vunpack.c.l.b16 %v193
    %v390 = vunpack.c.h.b16 %v193
    %v391 = vunpack.c.l.b16 %v194
    %v392 = vunpack.c.h.b16 %v194
    %v393 = vunpack.c.l.b16 %v195
    %v394 = vunpack.c.h.b16 %v195
    %v395 = vunpack.c.l.b16 %v196
    %v396 = vunpack.c.h.b16 %v196
    %v397 = vunpack.c.l.b16 %v197
    %v398 = vunpack.c.h.b16 %v197
    %v399 = vunpack.c.l.b16 %v198
    %v400 = vunpack.c.h.b16 %v198
    %v401 = vpack.c.b16 %v277, %v273
    %v402 = vpack.c.b16 %v278, %v274
    %v403 = vpack.c.b16 %v279, %v275
    %v404 = vpack.c.b16 %v280, %v276
    %v405 = vpack.c.b16 %v285, %v281
    %v406 = vpack.c.b16 %v286, %v282
    %v407 = vpack.c.b16 %v287, %v283
    %v408 = vpack.c.b16 %v288, %v284
    %v409 = vpack.c.b16 %v293, %v289
    %v410 = vpack.c.b16 %v294, %v290
    %v411 = vpack.c.b16 %v295, %v291
    %v412 = vpack.c.b16 %v296, %v292
    %v413 = vpack.c.b16 %v301, %v297
    %v414 = vpack.c.b16 %v302, %v298
    %v415 = vpack.c.b16 %v303, %v299
    %v416 = vpack.c.b16 %v304, %v300
    %v417 = vpack.c.b16 %v309, %v305
    %v418 = vpack.c.b16 %v310, %v306
    %v419 = vpack.c.b16 %v311, %v307
    %v420 = vpack.c.b16 %v312, %v308
    %v421 = vpack.c.b16 %v317, %v313
    %v422 = vpack.c.b16 %v318, %v314
    %v423 = vpack.c.b16 %v319, %v315
    %v424 = vpack.c.b16 %v320, %v316
    %v425 = vpack.c.b16 %v325, %v321
    %v426 = vpack.c.b16 %v326, %v322
    %v427 = vpack.c.b16 %v327, %v323
    %v428 = vpack.c.b16 %v328, %v324
    %v429 = vpack.c.b16 %v333, %v329
    %v430 = vpack.c.b16 %v334, %v330
    %v431 = vpack.c.b16 %v335, %v331
    %v432 = vpack.c.b16 %v336, %v332
    %v433 = vpack.c.b16 %v341, %v337
    %v434 = vpack.c.b16 %v342, %v338
    %v435 = vpack.c.b16 %v343, %v339
    %v436 = vpack.c.b16 %v344, %v340
    %v437 = vpack.c.b16 %v349, %v345
    %v438 = vpack.c.b16 %v350, %v346
    %v439 = vpack.c.b16 %v351, %v347
    %v440 = vpack.c.b16 %v352, %v348
    %v441 = vpack.c.b16 %v357, %v353
    %v442 = vpack.c.b16 %v358, %v354
    %v443 = vpack.c.b16 %v359, %v355
    %v444 = vpack.c.b16 %v360, %v356
    %v445 = vpack.c.b16 %v365, %v361
    %v446 = vpack.c.b16 %v366, %v362
    %v447 = vpack.c.b16 %v367, %v363
    %v448 = vpack.c.b16 %v368, %v364
    %v449 = vpack.c.b16 %v373, %v369
    %v450 = vpack.c.b16 %v374, %v370
    %v451 = vpack.c.b16 %v375, %v371
    %v452 = vpack.c.b16 %v376, %v372
    %v453 = vpack.c.b16 %v381, %v377
    %v454 = vpack.c.b16 %v382, %v378
    %v455 = vpack.c.b16 %v383, %v379
    %v456 = vpack.c.b16 %v384, %v380
    %v457 = vpack.c.b16 %v389, %v385
    %v458 = vpack.c.b16 %v390, %v386
    %v459 = vpack.c.b16 %v391, %v387
    %v460 = vpack.c.b16 %v392, %v388
    %v461 = vpack.c.b16 %v397, %v393
    %v462 = vpack.c.b16 %v398, %v394
    %v463 = vpack.c.b16 %v399, %v395
    %v464 = vpack.c.b16 %v400, %v396
    %529 = vmatpush.bf16.msra.mxu0 %v429
    %530 = vmatpush.bf16.msra.mxu0 %v425
    %531 = vmatpush.bf16.msra.mxu0 %v421
    %532 = vmatpush.bf16.msra.mxu0 %v417
    %533 = vmatpush.bf16.msra.mxu0 %v413
    %534 = vmatpush.bf16.msra.mxu0 %v409
    %535 = vmatpush.bf16.msra.mxu0 %v405
    %536 = vmatpush.bf16.msra.mxu0 %v401
    %537 = vmatmul.bf16.gmra.mxu0 %v205
    %v538 = vpop.f32.mrf.mxu0
    %v539 = vadd.f32 0.0, %v538
    %v540 = vpop.f32.mrf.mxu0
    %v541 = vadd.f32 0.0, %v540
    %542 = vdwg.mxu0
    %543 = vmatpush.bf16.msra.mxu0 %v461
    %544 = vmatpush.bf16.msra.mxu0 %v457
    %545 = vmatpush.bf16.msra.mxu0 %v453
    %546 = vmatpush.bf16.msra.mxu0 %v449
    %547 = vmatpush.bf16.msra.mxu0 %v445
    %548 = vmatpush.bf16.msra.mxu0 %v441
    %549 = vmatpush.bf16.msra.mxu0 %v437
    %550 = vmatpush.bf16.msra.mxu0 %v433
    %551 = vmatmul.bf16.gmra.mxu0 %v206
    %v552 = vpop.f32.mrf.mxu0
    %v553 = vadd.f32 %v539, %v552
    %v554 = vpop.f32.mrf.mxu0
    %v555 = vadd.f32 %v541, %v554
    %556 = vdwg.mxu0
    %557 = vmatpush.bf16.msra.mxu0 %v430
    %558 = vmatpush.bf16.msra.mxu0 %v426
    %559 = vmatpush.bf16.msra.mxu0 %v422
    %560 = vmatpush.bf16.msra.mxu0 %v418
    %561 = vmatpush.bf16.msra.mxu0 %v414
    %562 = vmatpush.bf16.msra.mxu0 %v410
    %563 = vmatpush.bf16.msra.mxu0 %v406
    %564 = vmatpush.bf16.msra.mxu0 %v402
    %565 = vmatmul.bf16.gmra.mxu0 %v205
    %v566 = vpop.f32.mrf.mxu0
    %v567 = vadd.f32 0.0, %v566
    %v568 = vpop.f32.mrf.mxu0
    %v569 = vadd.f32 0.0, %v568
    %570 = vdwg.mxu0
    %571 = vmatpush.bf16.msra.mxu0 %v462
    %572 = vmatpush.bf16.msra.mxu0 %v458
    %573 = vmatpush.bf16.msra.mxu0 %v454
    %574 = vmatpush.bf16.msra.mxu0 %v450
    %575 = vmatpush.bf16.msra.mxu0 %v446
    %576 = vmatpush.bf16.msra.mxu0 %v442
    %577 = vmatpush.bf16.msra.mxu0 %v438
    %578 = vmatpush.bf16.msra.mxu0 %v434
    %579 = vmatmul.bf16.gmra.mxu0 %v206
    %v580 = vpop.f32.mrf.mxu0
    %v581 = vadd.f32 %v567, %v580
    %v582 = vpop.f32.mrf.mxu0
    %v583 = vadd.f32 %v569, %v582
    %584 = vdwg.mxu0
    %585 = vmatpush.bf16.msra.mxu0 %v431
    %586 = vmatpush.bf16.msra.mxu0 %v427
    %587 = vmatpush.bf16.msra.mxu0 %v423
    %588 = vmatpush.bf16.msra.mxu0 %v419
    %589 = vmatpush.bf16.msra.mxu0 %v415
    %590 = vmatpush.bf16.msra.mxu0 %v411
    %591 = vmatpush.bf16.msra.mxu0 %v407
    %592 = vmatpush.bf16.msra.mxu0 %v403
    %593 = vmatmul.bf16.gmra.mxu0 %v205
    %v594 = vpop.f32.mrf.mxu0
    %v595 = vadd.f32 0.0, %v594
    %v596 = vpop.f32.mrf.mxu0
    %v597 = vadd.f32 0.0, %v596
    %598 = vdwg.mxu0
    %599 = vmatpush.bf16.msra.mxu0 %v463
    %600 = vmatpush.bf16.msra.mxu0 %v459
    %601 = vmatpush.bf16.msra.mxu0 %v455
    %602 = vmatpush.bf16.msra.mxu0 %v451
    %603 = vmatpush.bf16.msra.mxu0 %v447
    %604 = vmatpush.bf16.msra.mxu0 %v443
    %605 = vmatpush.bf16.msra.mxu0 %v439
    %606 = vmatpush.bf16.msra.mxu0 %v435
    %607 = vmatmul.bf16.gmra.mxu0 %v206
    %v608 = vpop.f32.mrf.mxu0
    %v609 = vadd.f32 %v595, %v608
    %v610 = vpop.f32.mrf.mxu0
    %v611 = vadd.f32 %v597, %v610
    %612 = vdwg.mxu0
    %613 = vmatpush.bf16.msra.mxu0 %v432
    %614 = vmatpush.bf16.msra.mxu0 %v428
    %615 = vmatpush.bf16.msra.mxu0 %v424
    %616 = vmatpush.bf16.msra.mxu0 %v420
    %617 = vmatpush.bf16.msra.mxu0 %v416
    %618 = vmatpush.bf16.msra.mxu0 %v412
    %619 = vmatpush.bf16.msra.mxu0 %v408
    %620 = vmatpush.bf16.msra.mxu0 %v404
    %621 = vmatmul.bf16.gmra.mxu0 %v205
    %v622 = vpop.f32.mrf.mxu0
    %v623 = vadd.f32 0.0, %v622
    %v624 = vpop.f32.mrf.mxu0
    %v625 = vadd.f32 0.0, %v624
    %626 = vdwg.mxu0
    %627 = vmatpush.bf16.msra.mxu0 %v464
    %628 = vmatpush.bf16.msra.mxu0 %v460
    %629 = vmatpush.bf16.msra.mxu0 %v456
    %630 = vmatpush.bf16.msra.mxu0 %v452
    %631 = vmatpush.bf16.msra.mxu0 %v448
    %632 = vmatpush.bf16.msra.mxu0 %v444
    %633 = vmatpush.bf16.msra.mxu0 %v440
    %634 = vmatpush.bf16.msra.mxu0 %v436
    %635 = vmatmul.bf16.gmra.mxu0 %v206
    %v636 = vpop.f32.mrf.mxu0
    %v637 = vadd.f32 %v623, %v636
    %v638 = vpop.f32.mrf.mxu0
    %v639 = vadd.f32 %v625, %v638
    %640 = vdwg.mxu0
    %vm649 = vcmask 1046528
    %v650 = vrot.slane %v553, 1
    %v651 = vrot.slane %v555, 1
    %v652 = vsel %vm649, %v650, %v651
    %v653 = vrot.slane %v581, 1
    %v654 = vrot.slane %v583, 1
    %v655 = vsel %vm649, %v653, %v654
    %v656 = vrot.slane %v609, 1
    %v657 = vrot.slane %v611, 1
    %v658 = vsel %vm649, %v656, %v657
    %v659 = vrot.slane %v637, 1
    %v660 = vrot.slane %v639, 1
    %v661 = vsel %vm649, %v659, %v660
    %v670 = vrot.slane %v553, 5
    %v671 = vrot.slane %v581, 5
    %v672 = vrot.slane %v609, 5
    %v673 = vrot.slane %v637, 5
    %vm678 = vcmask 1042432
    %v679 = vsel %vm678, %v651, %v670
    %v680 = vsel %vm678, %v654, %v671
    %v681 = vsel %vm678, %v657, %v672
    %v682 = vsel %vm678, %v660, %v673
    %v747 = vunpack.c.l.b16 %v71
    %v748 = vunpack.c.h.b16 %v71
    %v749 = vunpack.c.l.b16 %v72
    %v750 = vunpack.c.h.b16 %v72
    %v751 = vunpack.c.l.b16 %v73
    %v752 = vunpack.c.h.b16 %v73
    %v753 = vunpack.c.l.b16 %v74
    %v754 = vunpack.c.h.b16 %v74
    %v755 = vunpack.c.l.b16 %v75
    %v756 = vunpack.c.h.b16 %v75
    %v757 = vunpack.c.l.b16 %v76
    %v758 = vunpack.c.h.b16 %v76
    %v759 = vunpack.c.l.b16 %v77
    %v760 = vunpack.c.h.b16 %v77
    %v761 = vunpack.c.l.b16 %v78
    %v762 = vunpack.c.h.b16 %v78
    %v763 = vunpack.c.l.b16 %v79
    %v764 = vunpack.c.h.b16 %v79
    %v765 = vunpack.c.l.b16 %v80
    %v766 = vunpack.c.h.b16 %v80
    %v767 = vunpack.c.l.b16 %v81
    %v768 = vunpack.c.h.b16 %v81
    %v769 = vunpack.c.l.b16 %v82
    %v770 = vunpack.c.h.b16 %v82
    %v771 = vunpack.c.l.b16 %v83
    %v772 = vunpack.c.h.b16 %v83
    %v773 = vunpack.c.l.b16 %v84
    %v774 = vunpack.c.h.b16 %v84
    %v775 = vunpack.c.l.b16 %v85
    %v776 = vunpack.c.h.b16 %v85
    %v777 = vunpack.c.l.b16 %v86
    %v778 = vunpack.c.h.b16 %v86
    %v779 = vunpack.c.l.b16 %v87
    %v780 = vunpack.c.h.b16 %v87
    %v781 = vunpack.c.l.b16 %v88
    %v782 = vunpack.c.h.b16 %v88
    %v783 = vunpack.c.l.b16 %v89
    %v784 = vunpack.c.h.b16 %v89
    %v785 = vunpack.c.l.b16 %v90
    %v786 = vunpack.c.h.b16 %v90
    %v787 = vunpack.c.l.b16 %v91
    %v788 = vunpack.c.h.b16 %v91
    %v789 = vunpack.c.l.b16 %v92
    %v790 = vunpack.c.h.b16 %v92
    %v791 = vunpack.c.l.b16 %v93
    %v792 = vunpack.c.h.b16 %v93
    %v793 = vunpack.c.l.b16 %v94
    %v794 = vunpack.c.h.b16 %v94
    %v795 = vunpack.c.l.b16 %v95
    %v796 = vunpack.c.h.b16 %v95
    %v797 = vunpack.c.l.b16 %v96
    %v798 = vunpack.c.h.b16 %v96
    %v799 = vunpack.c.l.b16 %v97
    %v800 = vunpack.c.h.b16 %v97
    %v801 = vunpack.c.l.b16 %v98
    %v802 = vunpack.c.h.b16 %v98
    %v803 = vunpack.c.l.b16 %v99
    %v804 = vunpack.c.h.b16 %v99
    %v805 = vunpack.c.l.b16 %v100
    %v806 = vunpack.c.h.b16 %v100
    %v807 = vunpack.c.l.b16 %v101
    %v808 = vunpack.c.h.b16 %v101
    %v809 = vunpack.c.l.b16 %v102
    %v810 = vunpack.c.h.b16 %v102
    %v811 = vunpack.c.l.b16 %v103
    %v812 = vunpack.c.h.b16 %v103
    %v813 = vunpack.c.l.b16 %v104
    %v814 = vunpack.c.h.b16 %v104
    %v815 = vunpack.c.l.b16 %v105
    %v816 = vunpack.c.h.b16 %v105
    %v817 = vunpack.c.l.b16 %v106
    %v818 = vunpack.c.h.b16 %v106
    %v819 = vunpack.c.l.b16 %v107
    %v820 = vunpack.c.h.b16 %v107
    %v821 = vunpack.c.l.b16 %v108
    %v822 = vunpack.c.h.b16 %v108
    %v823 = vunpack.c.l.b16 %v109
    %v824 = vunpack.c.h.b16 %v109
    %v825 = vunpack.c.l.b16 %v110
    %v826 = vunpack.c.h.b16 %v110
    %v827 = vunpack.c.l.b16 %v111
    %v828 = vunpack.c.h.b16 %v111
    %v829 = vunpack.c.l.b16 %v112
    %v830 = vunpack.c.h.b16 %v112
    %v831 = vunpack.c.l.b16 %v113
    %v832 = vunpack.c.h.b16 %v113
    %v833 = vunpack.c.l.b16 %v114
    %v834 = vunpack.c.h.b16 %v114
    %v835 = vunpack.c.l.b16 %v115
    %v836 = vunpack.c.h.b16 %v115
    %v837 = vunpack.c.l.b16 %v116
    %v838 = vunpack.c.h.b16 %v116
    %v839 = vunpack.c.l.b16 %v117
    %v840 = vunpack.c.h.b16 %v117
    %v841 = vunpack.c.l.b16 %v118
    %v842 = vunpack.c.h.b16 %v118
    %v843 = vunpack.c.l.b16 %v119
    %v844 = vunpack.c.h.b16 %v119
    %v845 = vunpack.c.l.b16 %v120
    %v846 = vunpack.c.h.b16 %v120
    %v847 = vunpack.c.l.b16 %v121
    %v848 = vunpack.c.h.b16 %v121
    %v849 = vunpack.c.l.b16 %v122
    %v850 = vunpack.c.h.b16 %v122
    %v851 = vunpack.c.l.b16 %v123
    %v852 = vunpack.c.h.b16 %v123
    %v853 = vunpack.c.l.b16 %v124
    %v854 = vunpack.c.h.b16 %v124
    %v855 = vunpack.c.l.b16 %v125
    %v856 = vunpack.c.h.b16 %v125
    %v857 = vunpack.c.l.b16 %v126
    %v858 = vunpack.c.h.b16 %v126
    %v859 = vunpack.c.l.b16 %v127
    %v860 = vunpack.c.h.b16 %v127
    %v861 = vunpack.c.l.b16 %v128
    %v862 = vunpack.c.h.b16 %v128
    %v863 = vunpack.c.l.b16 %v129
    %v864 = vunpack.c.h.b16 %v129
    %v865 = vunpack.c.l.b16 %v130
    %v866 = vunpack.c.h.b16 %v130
    %v867 = vunpack.c.l.b16 %v131
    %v868 = vunpack.c.h.b16 %v131
    %v869 = vunpack.c.l.b16 %v132
    %v870 = vunpack.c.h.b16 %v132
    %v871 = vunpack.c.l.b16 %v133
    %v872 = vunpack.c.h.b16 %v133
    %v873 = vunpack.c.l.b16 %v134
    %v874 = vunpack.c.h.b16 %v134
    %v875 = vpack.c.b16 %v751, %v747
    %v876 = vpack.c.b16 %v752, %v748
    %v877 = vpack.c.b16 %v753, %v749
    %v878 = vpack.c.b16 %v754, %v750
    %v879 = vpack.c.b16 %v759, %v755
    %v880 = vpack.c.b16 %v760, %v756
    %v881 = vpack.c.b16 %v761, %v757
    %v882 = vpack.c.b16 %v762, %v758
    %v883 = vpack.c.b16 %v767, %v763
    %v884 = vpack.c.b16 %v768, %v764
    %v885 = vpack.c.b16 %v769, %v765
    %v886 = vpack.c.b16 %v770, %v766
    %v887 = vpack.c.b16 %v775, %v771
    %v888 = vpack.c.b16 %v776, %v772
    %v889 = vpack.c.b16 %v777, %v773
    %v890 = vpack.c.b16 %v778, %v774
    %v891 = vpack.c.b16 %v783, %v779
    %v892 = vpack.c.b16 %v784, %v780
    %v893 = vpack.c.b16 %v785, %v781
    %v894 = vpack.c.b16 %v786, %v782
    %v895 = vpack.c.b16 %v791, %v787
    %v896 = vpack.c.b16 %v792, %v788
    %v897 = vpack.c.b16 %v793, %v789
    %v898 = vpack.c.b16 %v794, %v790
    %v899 = vpack.c.b16 %v799, %v795
    %v900 = vpack.c.b16 %v800, %v796
    %v901 = vpack.c.b16 %v801, %v797
    %v902 = vpack.c.b16 %v802, %v798
    %v903 = vpack.c.b16 %v807, %v803
    %v904 = vpack.c.b16 %v808, %v804
    %v905 = vpack.c.b16 %v809, %v805
    %v906 = vpack.c.b16 %v810, %v806
    %v907 = vpack.c.b16 %v815, %v811
    %v908 = vpack.c.b16 %v816, %v812
    %v909 = vpack.c.b16 %v817, %v813
    %v910 = vpack.c.b16 %v818, %v814
    %v911 = vpack.c.b16 %v823, %v819
    %v912 = vpack.c.b16 %v824, %v820
    %v913 = vpack.c.b16 %v825, %v821
    %v914 = vpack.c.b16 %v826, %v822
    %v915 = vpack.c.b16 %v831, %v827
    %v916 = vpack.c.b16 %v832, %v828
    %v917 = vpack.c.b16 %v833, %v829
    %v918 = vpack.c.b16 %v834, %v830
    %v919 = vpack.c.b16 %v839, %v835
    %v920 = vpack.c.b16 %v840, %v836
    %v921 = vpack.c.b16 %v841, %v837
    %v922 = vpack.c.b16 %v842, %v838
    %v923 = vpack.c.b16 %v847, %v843
    %v924 = vpack.c.b16 %v848, %v844
    %v925 = vpack.c.b16 %v849, %v845
    %v926 = vpack.c.b16 %v850, %v846
    %v927 = vpack.c.b16 %v855, %v851
    %v928 = vpack.c.b16 %v856, %v852
    %v929 = vpack.c.b16 %v857, %v853
    %v930 = vpack.c.b16 %v858, %v854
    %v931 = vpack.c.b16 %v863, %v859
    %v932 = vpack.c.b16 %v864, %v860
    %v933 = vpack.c.b16 %v865, %v861
    %v934 = vpack.c.b16 %v866, %v862
    %v935 = vpack.c.b16 %v871, %v867
    %v936 = vpack.c.b16 %v872, %v868
    %v937 = vpack.c.b16 %v873, %v869
    %v938 = vpack.c.b16 %v874, %v870
    %1003 = vmatpush.bf16.msra.mxu0 %v903
    %1004 = vmatpush.bf16.msra.mxu0 %v899
    %1005 = vmatpush.bf16.msra.mxu0 %v895
    %1006 = vmatpush.bf16.msra.mxu0 %v891
    %1007 = vmatpush.bf16.msra.mxu0 %v887
    %1008 = vmatpush.bf16.msra.mxu0 %v883
    %1009 = vmatpush.bf16.msra.mxu0 %v879
    %1010 = vmatpush.bf16.msra.mxu0 %v875
    %1011 = vmatmul.bf16.gmra.mxu0 %v205
    %v1012 = vpop.f32.mrf.mxu0
    %v1013 = vadd.f32 %v652, %v1012
    %v1014 = vpop.f32.mrf.mxu0
    %v1015 = vadd.f32 %v679, %v1014
    %1016 = vdwg.mxu0
    %1017 = vmatpush.bf16.msra.mxu0 %v935
    %1018 = vmatpush.bf16.msra.mxu0 %v931
    %1019 = vmatpush.bf16.msra.mxu0 %v927
    %1020 = vmatpush.bf16.msra.mxu0 %v923
    %1021 = vmatpush.bf16.msra.mxu0 %v919
    %1022 = vmatpush.bf16.msra.mxu0 %v915
    %1023 = vmatpush.bf16.msra.mxu0 %v911
    %1024 = vmatpush.bf16.msra.mxu0 %v907
    %1025 = vmatmul.bf16.gmra.mxu0 %v206
    %v1026 = vpop.f32.mrf.mxu0
    %v1027 = vadd.f32 %v1013, %v1026
    %v1028 = vpop.f32.mrf.mxu0
    %v1029 = vadd.f32 %v1015, %v1028
    %1030 = vdwg.mxu0
    %1031 = vmatpush.bf16.msra.mxu0 %v904
    %1032 = vmatpush.bf16.msra.mxu0 %v900
    %1033 = vmatpush.bf16.msra.mxu0 %v896
    %1034 = vmatpush.bf16.msra.mxu0 %v892
    %1035 = vmatpush.bf16.msra.mxu0 %v888
    %1036 = vmatpush.bf16.msra.mxu0 %v884
    %1037 = vmatpush.bf16.msra.mxu0 %v880
    %1038 = vmatpush.bf16.msra.mxu0 %v876
    %1039 = vmatmul.bf16.gmra.mxu0 %v205
    %v1040 = vpop.f32.mrf.mxu0
    %v1041 = vadd.f32 %v655, %v1040
    %v1042 = vpop.f32.mrf.mxu0
    %v1043 = vadd.f32 %v680, %v1042
    %1044 = vdwg.mxu0
    %1045 = vmatpush.bf16.msra.mxu0 %v936
    %1046 = vmatpush.bf16.msra.mxu0 %v932
    %1047 = vmatpush.bf16.msra.mxu0 %v928
    %1048 = vmatpush.bf16.msra.mxu0 %v924
    %1049 = vmatpush.bf16.msra.mxu0 %v920
    %1050 = vmatpush.bf16.msra.mxu0 %v916
    %1051 = vmatpush.bf16.msra.mxu0 %v912
    %1052 = vmatpush.bf16.msra.mxu0 %v908
    %1053 = vmatmul.bf16.gmra.mxu0 %v206
    %v1054 = vpop.f32.mrf.mxu0
    %v1055 = vadd.f32 %v1041, %v1054
    %v1056 = vpop.f32.mrf.mxu0
    %v1057 = vadd.f32 %v1043, %v1056
    %1058 = vdwg.mxu0
    %1059 = vmatpush.bf16.msra.mxu0 %v905
    %1060 = vmatpush.bf16.msra.mxu0 %v901
    %1061 = vmatpush.bf16.msra.mxu0 %v897
    %1062 = vmatpush.bf16.msra.mxu0 %v893
    %1063 = vmatpush.bf16.msra.mxu0 %v889
    %1064 = vmatpush.bf16.msra.mxu0 %v885
    %1065 = vmatpush.bf16.msra.mxu0 %v881
    %1066 = vmatpush.bf16.msra.mxu0 %v877
    %1067 = vmatmul.bf16.gmra.mxu0 %v205
    %v1068 = vpop.f32.mrf.mxu0
    %v1069 = vadd.f32 %v658, %v1068
    %v1070 = vpop.f32.mrf.mxu0
    %v1071 = vadd.f32 %v681, %v1070
    %1072 = vdwg.mxu0
    %1073 = vmatpush.bf16.msra.mxu0 %v937
    %1074 = vmatpush.bf16.msra.mxu0 %v933
    %1075 = vmatpush.bf16.msra.mxu0 %v929
    %1076 = vmatpush.bf16.msra.mxu0 %v925
    %1077 = vmatpush.bf16.msra.mxu0 %v921
    %1078 = vmatpush.bf16.msra.mxu0 %v917
    %1079 = vmatpush.bf16.msra.mxu0 %v913
    %1080 = vmatpush.bf16.msra.mxu0 %v909
    %1081 = vmatmul.bf16.gmra.mxu0 %v206
    %v1082 = vpop.f32.mrf.mxu0
    %v1083 = vadd.f32 %v1069, %v1082
    %v1084 = vpop.f32.mrf.mxu0
    %v1085 = vadd.f32 %v1071, %v1084
    %1086 = vdwg.mxu0
    %1087 = vmatpush.bf16.msra.mxu0 %v906
    %1088 = vmatpush.bf16.msra.mxu0 %v902
    %1089 = vmatpush.bf16.msra.mxu0 %v898
    %1090 = vmatpush.bf16.msra.mxu0 %v894
    %1091 = vmatpush.bf16.msra.mxu0 %v890
    %1092 = vmatpush.bf16.msra.mxu0 %v886
    %1093 = vmatpush.bf16.msra.mxu0 %v882
    %1094 = vmatpush.bf16.msra.mxu0 %v878
    %1095 = vmatmul.bf16.gmra.mxu0 %v205
    %v1096 = vpop.f32.mrf.mxu0
    %v1097 = vadd.f32 %v661, %v1096
    %v1098 = vpop.f32.mrf.mxu0
    %v1099 = vadd.f32 %v682, %v1098
    %1100 = vdwg.mxu0
    %1101 = vmatpush.bf16.msra.mxu0 %v938
    %1102 = vmatpush.bf16.msra.mxu0 %v934
    %1103 = vmatpush.bf16.msra.mxu0 %v930
    %1104 = vmatpush.bf16.msra.mxu0 %v926
    %1105 = vmatpush.bf16.msra.mxu0 %v922
    %1106 = vmatpush.bf16.msra.mxu0 %v918
    %1107 = vmatpush.bf16.msra.mxu0 %v914
    %1108 = vmatpush.bf16.msra.mxu0 %v910
    %1109 = vmatmul.bf16.gmra.mxu0 %v206
    %v1110 = vpop.f32.mrf.mxu0
    %v1111 = vadd.f32 %v1097, %v1110
    %v1112 = vpop.f32.mrf.mxu0
    %v1113 = vadd.f32 %v1099, %v1112
    %1114 = vdwg.mxu0
    %v1115 = vmul.f32 %v1027, %v1027
    %v1116 = vmul.f32 %v1055, %v1055
    %v1117 = vmul.f32 %v1029, %v1029
    %v1118 = vmul.f32 %v1057, %v1057
    %v1119 = vmul.f32 %v1083, %v1083
    %v1120 = vmul.f32 %v1111, %v1111
    %v1121 = vmul.f32 %v1085, %v1085
    %v1122 = vmul.f32 %v1113, %v1113
    %v1123 = vadd.f32 %v1115, %v1119
    %v1124 = vadd.f32 %v1116, %v1120
    %v1125 = vadd.f32 %v1117, %v1121
    %v1126 = vadd.f32 %v1118, %v1122
    %v1127 = vld [vmem:[#allocation7] sm:$0xff]
    %v1128 = vld [vmem:[#allocation7 + $0x8] sm:$0xff]
    %v1129 = vld [vmem:[#allocation7 + $0x10] sm:$0xff]
    %v1130 = vld [vmem:[#allocation7 + $0x18] sm:$0xff]
    %v1131 = vld [vmem:[#allocation7 + $0x20] sm:$0xff]
    %v1132 = vld [vmem:[#allocation7 + $0x28] sm:$0xff]
    %v1133 = vld [vmem:[#allocation7 + $0x30] sm:$0xff]
    %v1134 = vld [vmem:[#allocation7 + $0x38] sm:$0xff]
    %v1135 = vld [vmem:[#allocation7 + $0x40] sm:$0xff]
    %v1136 = vld [vmem:[#allocation7 + $0x48] sm:$0xff]
    %v1137 = vld [vmem:[#allocation7 + $0x50] sm:$0xff]
    %v1138 = vld [vmem:[#allocation7 + $0x58] sm:$0xff]
    %v1139 = vld [vmem:[#allocation7 + $0x60] sm:$0xff]
    %v1140 = vld [vmem:[#allocation7 + $0x68] sm:$0xff]
    %v1141 = vld [vmem:[#allocation7 + $0x70] sm:$0xff]
    %v1142 = vld [vmem:[#allocation7 + $0x78] sm:$0xff]
    %v1143 = vld [vmem:[#allocation7 + $0x80] sm:$0xff]
    %v1144 = vld [vmem:[#allocation7 + $0x88] sm:$0xff]
    %v1145 = vld [vmem:[#allocation7 + $0x90] sm:$0xff]
    %v1146 = vld [vmem:[#allocation7 + $0x98] sm:$0xff]
    %v1147 = vld [vmem:[#allocation7 + $0xa0] sm:$0xff]
    %v1148 = vld [vmem:[#allocation7 + $0xa8] sm:$0xff]
    %v1149 = vld [vmem:[#allocation7 + $0xb0] sm:$0xff]
    %v1150 = vld [vmem:[#allocation7 + $0xb8] sm:$0xff]
    %v1151 = vld [vmem:[#allocation7 + $0xc0] sm:$0xff]
    %v1152 = vld [vmem:[#allocation7 + $0xc8] sm:$0xff]
    %v1153 = vld [vmem:[#allocation7 + $0xd0] sm:$0xff]
    %v1154 = vld [vmem:[#allocation7 + $0xd8] sm:$0xff]
    %v1155 = vld [vmem:[#allocation7 + $0xe0] sm:$0xff]
    %v1156 = vld [vmem:[#allocation7 + $0xe8] sm:$0xff]
    %v1157 = vld [vmem:[#allocation7 + $0xf0] sm:$0xff]
    %v1158 = vld [vmem:[#allocation7 + $0xf8] sm:$0xff]
    %1159 = vmatpush.msra.mxu0 %v1142
    %1160 = vmatpush.msra.mxu0 %v1141
    %1161 = vmatpush.msra.mxu0 %v1140
    %1162 = vmatpush.msra.mxu0 %v1139
    %1163 = vmatpush.msra.mxu0 %v1138
    %1164 = vmatpush.msra.mxu0 %v1137
    %1165 = vmatpush.msra.mxu0 %v1136
    %1166 = vmatpush.msra.mxu0 %v1135
    %1167 = vmatpush.msra.mxu0 %v1134
    %1168 = vmatpush.msra.mxu0 %v1133
    %1169 = vmatpush.msra.mxu0 %v1132
    %1170 = vmatpush.msra.mxu0 %v1131
    %1171 = vmatpush.msra.mxu0 %v1130
    %1172 = vmatpush.msra.mxu0 %v1129
    %1173 = vmatpush.msra.mxu0 %v1128
    %1174 = vmatpush.msra.mxu0 %v1127
    %1175 = vmatmul.f32.gmra.mxu0 %v1123
    %v1176 = vpop.f32.mrf.mxu0
    %v1177 = vadd.f32 0.0, %v1176
    %1178 = vmatmul.f32.gmra.mxu0 %v1125
    %v1179 = vpop.f32.mrf.mxu0
    %v1180 = vadd.f32 0.0, %v1179
    %1181 = vdwg.mxu0
    %1182 = vmatpush.msra.mxu0 %v1158
    %1183 = vmatpush.msra.mxu0 %v1157
    %1184 = vmatpush.msra.mxu0 %v1156
    %1185 = vmatpush.msra.mxu0 %v1155
    %1186 = vmatpush.msra.mxu0 %v1154
    %1187 = vmatpush.msra.mxu0 %v1153
    %1188 = vmatpush.msra.mxu0 %v1152
    %1189 = vmatpush.msra.mxu0 %v1151
    %1190 = vmatpush.msra.mxu0 %v1150
    %1191 = vmatpush.msra.mxu0 %v1149
    %1192 = vmatpush.msra.mxu0 %v1148
    %1193 = vmatpush.msra.mxu0 %v1147
    %1194 = vmatpush.msra.mxu0 %v1146
    %1195 = vmatpush.msra.mxu0 %v1145
    %1196 = vmatpush.msra.mxu0 %v1144
    %1197 = vmatpush.msra.mxu0 %v1143
    %1198 = vmatmul.f32.gmra.mxu0 %v1124
    %v1199 = vpop.f32.mrf.mxu0
    %v1200 = vadd.f32 %v1177, %v1199
    %1201 = vmatmul.f32.gmra.mxu0 %v1126
    %v1202 = vpop.f32.mrf.mxu0
    %v1203 = vadd.f32 %v1180, %v1202
    %1204 = vdwg.mxu0
    %v1205 = vstv %s68
    %v1206 = vmul.f32 %v1200, %v1205
    %v1207 = vmul.f32 %v1203, %v1205
    %1208 = vst [vmem:[%s5] sm:$0xff] %v1206
    %1209 = vst [vmem:[%s5 + $0x8] sm:$0xf] %v1207
    // Predicated region
    $region34: #{audio_preprocessing_forward.1} parent=1 // pred_check
      _
    $region35: #{audio_preprocessing_forward.1} parent=1 // pred_check_branch
      %1211 = sbr.rel (0) target = $region37
    $region36: #{audio_preprocessing_forward.1} parent=1 // pred_region
      _
    $region37: #{audio_preprocessing_forward.1} parent=1 // pred_fallthru
      _
    // Predicated region
    $region38: #{audio_preprocessing_forward.1} parent=1 // pred_check
      _
    $region39: #{audio_preprocessing_forward.1} parent=1 // pred_check_branch
      %1213 = sbr.rel (0) target = $region41
    $region40: #{audio_preprocessing_forward.1} parent=1 // pred_region
      _
    $region41: #{audio_preprocessing_forward.1} parent=1 // pred_fallthru
      _
    %1214 = vsyncpa [#allocation4], 1
    %1215 = vsyncpa [#allocation6], 1

</llo_original>
